<compile_context>
chip_gen: v5e
topology: v5e:2x2
jax: 0.10.0
libtpu: 0.0.40
codegen_flags: <defaults>
</compile_context>

<pallas_src>
import numpy as np
import jax
import jax.numpy as jnp
from jax.experimental import pallas as pl
from jax.experimental.pallas import tpu as pltpu

BN_EPS = 1e-5
_VMEM_LIMIT_BYTES = 32 * 1024 * 1024   # explicit, fits every TPU generation


def _round_up(x, m):
    return (x + m - 1) // m * m


# --------------------------------------------------------------------------
# Pallas kernels
# --------------------------------------------------------------------------

def _conv1x1_bn_relu_kernel(x_ref, w_ref, shift_ref, o_ref):
    """1x1 conv + folded-BN + ReLU == matmul over flattened pixels.

    x_ref:     (tm, c_in)   f32 row tile of flattened (N*H*W, c_in) activations
    w_ref:     (c_in, Cpad) bf16 weights with BN scale folded, lanes padded to 128
    shift_ref: (1, Cpad)    f32 folded BN shift
    o_ref:     (tm, Cpad)   f32 lane-dense output tile
    """
    acc = jnp.dot(x_ref[...].astype(jnp.bfloat16), w_ref[...],
                  preferred_element_type=jnp.float32)
    o_ref[...] = jnp.maximum(acc + shift_ref[...], 0.0).astype(o_ref.dtype)


def _conv3x3_bn_relu_kernel(x_ref, w_ref, shift_ref, o_ref, xpad_ref):
    """3x3 / stride-1 / SAME conv + folded-BN + ReLU for one image.

    x_ref:     (H, W, c_in)     f32 activation block (batch dim squeezed)
    w_ref:     (9*c_in, Cpad)   bf16 weights, BN scale folded, lanes padded to 128
    shift_ref: (1, Cpad)        f32 folded BN shift
    o_ref:     (H, W, Cpad)     f32 lane-dense output block
    xpad_ref:  (H+2, W+2, c_in) f32 VMEM scratch (zero-padded activation)
    """
    H, W, c_in = x_ref.shape
    cpad = o_ref.shape[-1]

    # zero-pad entirely inside VMEM (no HBM round trip, no im2col in HBM)
    xpad_ref[...] = jnp.zeros(xpad_ref.shape, xpad_ref.dtype)
    xpad_ref[1:1 + H, 1:1 + W, :] = x_ref[...]

    # start the f32 accumulator from the folded-BN shift -> epilogue is just ReLU
    acc = jnp.broadcast_to(shift_ref[...], (H * W, cpad))
    t = 0
    for ky in range(3):
        for kx in range(3):
            xt = xpad_ref[ky:ky + H, kx:kx + W, :].reshape(H * W, c_in)
            acc = acc + jnp.dot(xt.astype(jnp.bfloat16),
                                w_ref[t * c_in:(t + 1) * c_in, :],
                                preferred_element_type=jnp.float32)
            t += 1

    o_ref[...] = jnp.maximum(acc, 0.0).reshape(H, W, cpad).astype(o_ref.dtype)


def _maxpool3x3_kernel(x_ref, o_ref, xpad_ref):
    """3x3 / stride 1 / pad 1 max pool (PyTorch -inf padding) for one image.

    Padding is done into a VMEM scratch in-kernel; the 3x3 max is separable
    (3x1 row max followed by 1x3 column max -> 4 maxes instead of 8)."""
    H, W, _ = x_ref.shape
    xpad_ref[...] = jnp.full(xpad_ref.shape, -jnp.inf, xpad_ref.dtype)
    xpad_ref[1:1 + H, 1:1 + W, :] = x_ref[...]
    rm = jnp.maximum(jnp.maximum(xpad_ref[0:H, :, :], xpad_ref[1:1 + H, :, :]),
                     xpad_ref[2:2 + H, :, :])           # (H, W+2, C)
    out = jnp.maximum(jnp.maximum(rm[:, 0:W, :], rm[:, 1:1 + W, :]),
                      rm[:, 2:2 + W, :])                # (H, W, C)
    o_ref[...] = out.astype(o_ref.dtype)


# --------------------------------------------------------------------------
# Wrappers (NHWC)
# --------------------------------------------------------------------------

def _fold_bn_weights(p, c_out, c_in, ksize):
    """Slice channels, fold BN scale into the conv weight, pad lanes to 128."""
    w = p["w"][:c_out, :c_in]                                  # (c_out, c_in, k, k)
    scale = p["gamma"][:c_out] * jax.lax.rsqrt(p["var"][:c_out] + BN_EPS)
    shift = p["beta"][:c_out] - p["mean"][:c_out] * scale
    # (k,k,c_in,c_out) -> (k*k*c_in, c_out); fold BN scale; pad lanes; bf16.
    w2d = jnp.transpose(w, (2, 3, 1, 0)).reshape(ksize * ksize * c_in, c_out)
    w2d = w2d * scale[None, :]
    cpad = _round_up(max(c_out, 128), 128)
    w2d = jnp.pad(w2d, ((0, 0), (0, cpad - c_out))).astype(jnp.bfloat16)
    shift_p = jnp.pad(shift, (0, cpad - c_out)).reshape(1, cpad).astype(jnp.float32)
    return w2d, shift_p, cpad


def conv1x1_bn_relu(p, x, c_out):
    """ConvBNRelu.forward(x, c_out), kernel_size=1, as one row-tiled matmul."""
    N, H, W, c_in = x.shape
    w2d, shift_p, cpad = _fold_bn_weights(p, c_out, c_in, 1)

    rows = N * H * W
    xm = x.reshape(rows, c_in)
    tm = rows if rows <= 256 else 256          # rows<=256: single full block
    grid = (pl.cdiv(rows, tm),)

    out = pl.pallas_call(
        _conv1x1_bn_relu_kernel,
        out_shape=jax.ShapeDtypeStruct((rows, cpad), jnp.float32),
        grid=grid,
        in_specs=[
            pl.BlockSpec((tm, c_in), lambda i: (i, 0)),
            pl.BlockSpec((c_in, cpad), lambda i: (0, 0)),
            pl.BlockSpec((1, cpad), lambda i: (0, 0)),
        ],
        out_specs=pl.BlockSpec((tm, cpad), lambda i: (i, 0)),
        compiler_params=pltpu.CompilerParams(
            dimension_semantics=("parallel",),
            vmem_limit_bytes=_VMEM_LIMIT_BYTES),
    )(xm, w2d, shift_p)
    return out[:, :c_out].reshape(N, H, W, c_out)


def conv3x3_bn_relu(p, x, c_out):
    """ConvBNRelu.forward(x, c_out), kernel_size=3, stride 1, SAME padding."""
    N, H, W, c_in = x.shape
    w2d, shift_p, cpad = _fold_bn_weights(p, c_out, c_in, 3)

    out = pl.pallas_call(
        _conv3x3_bn_relu_kernel,
        out_shape=jax.ShapeDtypeStruct((N, H, W, cpad), jnp.float32),
        grid=(N,),
        in_specs=[
            pl.BlockSpec((None, H, W, c_in), lambda n: (n, 0, 0, 0)),
            pl.BlockSpec((9 * c_in, cpad), lambda n: (0, 0)),
            pl.BlockSpec((1, cpad), lambda n: (0, 0)),
        ],
        out_specs=pl.BlockSpec((None, H, W, cpad), lambda n: (n, 0, 0, 0)),
        scratch_shapes=[pltpu.VMEM((H + 2, W + 2, c_in), jnp.float32)],
        compiler_params=pltpu.CompilerParams(
            dimension_semantics=("parallel",),
            vmem_limit_bytes=_VMEM_LIMIT_BYTES),
    )(x, w2d, shift_p)
    return out[..., :c_out]


def maxpool3x3(x):
    """3x3 max pool, stride 1, pad 1 (NHWC, -inf padding semantics)."""
    N, H, W, C = x.shape
    return pl.pallas_call(
        _maxpool3x3_kernel,
        out_shape=jax.ShapeDtypeStruct((N, H, W, C), x.dtype),
        grid=(N,),
        in_specs=[pl.BlockSpec((None, H, W, C), lambda n: (n, 0, 0, 0))],
        out_specs=pl.BlockSpec((None, H, W, C), lambda n: (n, 0, 0, 0)),
        scratch_shapes=[pltpu.VMEM((H + 2, W + 2, C), x.dtype)],
        compiler_params=pltpu.CompilerParams(
            dimension_semantics=("parallel",),
            vmem_limit_bytes=_VMEM_LIMIT_BYTES),
    )(x)


# --------------------------------------------------------------------------
# NodeCNN forward (single_k=False): ops = [MaxPool, Conv1x1BNRelu, Conv3x3BNRelu]
# --------------------------------------------------------------------------

def node_forward(node_p, x_nchw, id_op, c_out):
    x = jnp.transpose(x_nchw, (0, 2, 3, 1))                    # NCHW -> NHWC
    id_op = int(id_op)                                         # static, like torch
    if id_op == 0:
        y = maxpool3x3(x[..., :c_out])
    elif id_op == 1:
        y = conv1x1_bn_relu(node_p["conv1"], x, c_out)
    else:
        y = conv3x3_bn_relu(node_p["conv3"], x, c_out)
    return jnp.transpose(y, (0, 3, 1, 2))                      # NHWC -> NCHW


# --------------------------------------------------------------------------
# Pure-JAX reference (f32) for validation
# --------------------------------------------------------------------------

def _conv_bn_relu_ref(p, x, c_out, ksize):
    N, H, W, c_in = x.shape
    w = p["w"][:c_out, :c_in]
    scale = p["gamma"][:c_out] / jnp.sqrt(p["var"][:c_out] + BN_EPS)
    shift = p["beta"][:c_out] - p["mean"][:c_out] * scale
    y = jax.lax.conv_general_dilated(
        x, jnp.transpose(w, (2, 3, 1, 0)), (1, 1),
        [(ksize // 2, ksize // 2)] * 2,
        dimension_numbers=("NHWC", "HWIO", "NHWC"))
    return jnp.maximum(y * scale + shift, 0.0)


def node_forward_ref(node_p, x_nchw, id_op, c_out):
    x = jnp.transpose(x_nchw, (0, 2, 3, 1))
    id_op = int(id_op)
    if id_op == 0:
        y = jax.lax.reduce_window(
            x[..., :c_out], -jnp.inf, jax.lax.max,
            (1, 3, 3, 1), (1, 1, 1, 1), ((0, 0), (1, 1), (1, 1), (0, 0)))
    elif id_op == 1:
        y = _conv_bn_relu_ref(node_p["conv1"], x, c_out, 1)
    else:
        y = _conv_bn_relu_ref(node_p["conv3"], x, c_out, 3)
    return jnp.transpose(y, (0, 3, 1, 2))


# --------------------------------------------------------------------------
# Deterministic parameter init (bias-free conv + BN eval-mode stats)
# --------------------------------------------------------------------------

def init_conv_bn(key, c_in_max, c_out_max, ksize):
    kw, kg, kb, km, kv = jax.random.split(key, 5)
    fan_in = c_in_max * ksize * ksize
    return {
        "w": jax.random.normal(kw, (c_out_max, c_in_max, ksize, ksize),
                               jnp.float32) / np.sqrt(fan_in),
        "gamma": 1.0 + 0.1 * jax.random.normal(kg, (c_out_max,), jnp.float32),
        "beta": 0.1 * jax.random.normal(kb, (c_out_max,), jnp.float32),
        "mean": 0.1 * jax.random.normal(km, (c_out_max,), jnp.float32),
        "var": 0.5 + jax.random.uniform(kv, (c_out_max,), jnp.float32),
    }


# --------------------------------------------------------------------------
# main
# --------------------------------------------------------------------------

if __name__ == "__main__":
    N, H, W = 2, 8, 8
    c_out_max = 16                       # NodeCNN: c_in_max == c_out_max

    key = jax.random.PRNGKey(0)
    k1, k2, kx = jax.random.split(key, 3)
    node_params = {
        "conv1": init_conv_bn(k1, c_out_max, c_out_max, 1),
        "conv3": init_conv_bn(k2, c_out_max, c_out_max, 3),
    }
    x = jax.random.normal(kx, (N, c_out_max, H, W), jnp.float32)   # NCHW like torch

    # exercise all three ops and channel slicing: (id_op, c_out)
    cases = [(0, 8), (1, 12), (2, 16)]
    for id_op, c_out in cases:
        out = jax.block_until_ready(node_forward(node_params, x, id_op, c_out))
        assert out.shape == (N, c_out, H, W), (id_op, out.shape)
        ref = jax.block_until_ready(node_forward_ref(node_params, x, id_op, c_out))
        if id_op == 0:
            # maxpool path is exact f32
            np.testing.assert_allclose(np.asarray(out), np.asarray(ref),
                                       atol=1e-6, rtol=1e-6)
        else:
            # conv paths use bf16 MXU operands (f32 accumulate) -> loosened tol
            np.testing.assert_allclose(np.asarray(out), np.asarray(ref),
                                       atol=2e-2, rtol=2e-2)

    print("KERNEL_OK")
</pallas_src>

<mosaic_0001>
module attributes {stable_mosaic.version = 11 : i64} {
  func.func @_maxpool3x3_kernel(%arg0: i32, %arg1: memref<1x8x8x8xf32, #tpu.memory_space<vmem>>, %arg2: memref<1x8x8x8xf32, #tpu.memory_space<vmem>>, %arg3: memref<10x10x8xf32, #tpu.memory_space<vmem>>) attributes {dimension_semantics = [#tpu.dimension_semantics<parallel>], iteration_bounds = array<i64: 2>, scalar_prefetch = 0 : i64, scratch_operands = 1 : i64, tpu.core_type = #tpu.core_type<tc>, window_params = [{transform_indices = @transform_0, window_bounds = array<i64: 1, 8, 8, 8>}, {transform_indices = @transform_1, window_bounds = array<i64: 1, 8, 8, 8>}]} {
    %cst = arith.constant 0xFF800000 : f32
    %0 = vector.broadcast %cst : f32 to vector<10x10x8xf32>
    %c0 = arith.constant 0 : index
    %c0_0 = arith.constant 0 : index
    %c0_1 = arith.constant 0 : index
    %1 = vector.load %arg3[%c0, %c0_0, %c0_1] : memref<10x10x8xf32, #tpu.memory_space<vmem>>, vector<10x10x8xf32>
    tpu.vector_store %arg3[%c0, %c0_0, %c0_1], %0 {strides = array<i32>} : memref<10x10x8xf32, #tpu.memory_space<vmem>>, vector<10x10x8xf32>,
    %c0_2 = arith.constant 0 : index
    %c0_3 = arith.constant 0 : index
    %c0_4 = arith.constant 0 : index
    %c0_5 = arith.constant 0 : index
    %2 = vector.load %arg1[%c0_2, %c0_3, %c0_4, %c0_5] : memref<1x8x8x8xf32, #tpu.memory_space<vmem>>, vector<1x8x8x8xf32>
    %3 = vector.shape_cast %2 : vector<1x8x8x8xf32> to vector<8x8x8xf32>
    %c1 = arith.constant 1 : index
    %c1_6 = arith.constant 1 : index
    %c0_7 = arith.constant 0 : index
    %4 = vector.load %arg3[%c1, %c1_6, %c0_7] : memref<10x10x8xf32, #tpu.memory_space<vmem>>, vector<8x8x8xf32>
    tpu.vector_store %arg3[%c1, %c1_6, %c0_7], %3 {strides = array<i32>} : memref<10x10x8xf32, #tpu.memory_space<vmem>>, vector<8x8x8xf32>,
    %c0_8 = arith.constant 0 : index
    %c0_9 = arith.constant 0 : index
    %c0_10 = arith.constant 0 : index
    %5 = vector.load %arg3[%c0_8, %c0_9, %c0_10] : memref<10x10x8xf32, #tpu.memory_space<vmem>>, vector<8x10x8xf32>
    %c1_11 = arith.constant 1 : index
    %c0_12 = arith.constant 0 : index
    %c0_13 = arith.constant 0 : index
    %6 = vector.load %arg3[%c1_11, %c0_12, %c0_13] : memref<10x10x8xf32, #tpu.memory_space<vmem>>, vector<8x10x8xf32>
    %7 = arith.maximumf %5, %6 : vector<8x10x8xf32>
    %c2 = arith.constant 2 : index
    %c0_14 = arith.constant 0 : index
    %c0_15 = arith.constant 0 : index
    %8 = vector.load %arg3[%c2, %c0_14, %c0_15] : memref<10x10x8xf32, #tpu.memory_space<vmem>>, vector<8x10x8xf32>
    %9 = arith.maximumf %7, %8 : vector<8x10x8xf32>
    %10 = vector.extract_strided_slice %9 {offsets = [0, 0, 0], sizes = [8, 8, 8], strides = [1, 1, 1]} : vector<8x10x8xf32> to vector<8x8x8xf32>
    %11 = vector.extract_strided_slice %9 {offsets = [0, 1, 0], sizes = [8, 8, 8], strides = [1, 1, 1]} : vector<8x10x8xf32> to vector<8x8x8xf32>
    %12 = arith.maximumf %10, %11 : vector<8x8x8xf32>
    %13 = vector.extract_strided_slice %9 {offsets = [0, 2, 0], sizes = [8, 8, 8], strides = [1, 1, 1]} : vector<8x10x8xf32> to vector<8x8x8xf32>
    %14 = arith.maximumf %12, %13 : vector<8x8x8xf32>
    %c0_16 = arith.constant 0 : index
    %c0_17 = arith.constant 0 : index
    %c0_18 = arith.constant 0 : index
    %c0_19 = arith.constant 0 : index
    %15 = vector.load %arg2[%c0_16, %c0_17, %c0_18, %c0_19] : memref<1x8x8x8xf32, #tpu.memory_space<vmem>>, vector<1x8x8x8xf32>
    %16 = vector.shape_cast %15 : vector<1x8x8x8xf32> to vector<8x8x8xf32>
    %17 = vector.shape_cast %14 : vector<8x8x8xf32> to vector<1x8x8x8xf32>
    tpu.vector_store %arg2[%c0_16, %c0_17, %c0_18, %c0_19], %17 {strides = array<i32>} : memref<1x8x8x8xf32, #tpu.memory_space<vmem>>, vector<1x8x8x8xf32>,
    return
  }
  func.func @transform_0(%arg0: i32) -> (i32, i32, i32, i32) {
    %c0_i32 = arith.constant 0 : i32
    %c0_i32_0 = arith.constant 0 : i32
    %c0_i32_1 = arith.constant 0 : i32
    %c0_i32_2 = arith.constant 0 : i32
    return %arg0, %c0_i32, %c0_i32_0, %c0_i32_1 : i32, i32, i32, i32
  }
  func.func @transform_1(%arg0: i32) -> (i32, i32, i32, i32) {
    %c0_i32 = arith.constant 0 : i32
    %c0_i32_0 = arith.constant 0 : i32
    %c0_i32_1 = arith.constant 0 : i32
    %c0_i32_2 = arith.constant 0 : i32
    return %arg0, %c0_i32, %c0_i32_0, %c0_i32_1 : i32, i32, i32, i32
  }
}

</mosaic_0001>

<llo_original>
// kernel: tpu_custom_call.1
$region0: #{tpu_custom_call.1}
  #allocation0 [shape = 'u32[]', space=smem, size = 0x4, offset = 0x4, fixed_abs, tag = 'smem constant byte address 0x4 - core index']
  #allocation1 [shape = 'u32[72,128]{1,0:T(1,128)}', space=vmem, size = 0x9000, scoped, tag = 'internal scratch']
  #allocation2 [shape = 'f32[10,10,8]{2,1,0:T(8,128)}', space=vmem, size = 0x14000, scoped, tag = 'scratch operand']
  %s0 = inlined_call_operand.hbm [shape: f32[2,8,8,8], index: 0, kind: input, shape index: {}]
  %s1 = inlined_call_operand.hbm [shape: f32[2,8,8,8], index: 1, kind: output, shape index: {}]
  %s2 = sld [smem:[#allocation0]]
  $region41: #{tpu_custom_call.1} parent=0
    _
  %s4 = ssub.s32 1, %s2
  %s5 = scalar_select 0, %s4, %s2
  $region1: #{tpu_custom_call.1} parent=0
    #allocation3 [shape = 'u8[65536]{0}', space=vmem, size = 0x10000, scoped, tag = 'input window, operand 0']
    #allocation4 [shape = 's32[2]{0}', space=sflag, size = 0x8, scoped, tag = 'scoped memory for tpu_custom_call.1']
    #allocation5 [shape = 's32[2]{0}', space=sflag, size = 0x8, scoped, tag = 'scoped memory for tpu_custom_call.1']
    #allocation6 [shape = 'u8[65536]{0}', space=vmem, size = 0x10000, scoped, tag = 'output window, operand 0']
    %6 = vsyncpa [#allocation4], 0
    %s7 = scalar_lea.sflag [#allocation4], 1
    %8 = vsyncpa %s7, 0
    %9 = vsyncpa [#allocation5], 0
    %s10 = scalar_lea.sflag [#allocation5], 1
    %11 = vsyncpa %s10, 0
    loop: start=0, step=1, limit=4
    $region2: #{tpu_custom_call.1} parent=1 // loop_pre_header
      _
    $region3: #{tpu_custom_call.1} parent=1 // loop_header
      %s13 = sphi 0, %s17
      %p14 = scmp.ge.s32.totalorder %s13, 4
      %s23 = sphi 0, %s25
      %s26 = sphi 0, %s23
      %s27 = sphi 0, %s26
      %s43 = sphi 0, %s27
      %s49 = sphi 0, %s51
      %s52 = sphi 0, %s49
      %s53 = sphi 0, %s52
      %s69 = sphi 0, %s53
    $region4: #{tpu_custom_call.1} parent=1 // loop_header_branch
      %16 = sbr.rel (%p14) target = $region8
    $region5: #{tpu_custom_call.1} parent=1 // loop_body
      %s18 = ssub.s32 %s13, 1
      %s19 = ssub.s32 %s13, 2
      %s20 = sadd.s32 %s13, 1
      %s21 = ssub.s32 %s13, %s20
      %p22 = scmp.eq.s32.totalorder %s21, 0
      %s24 = sadd.s32 %s23, 1
      %s25 = scalar_select %p22, %s23, %s24
      %p28 = pneg %p22
      %p29 = scmp.eq.s32.totalorder %s13, 1
      %p30 = por %p28, %p29
      %p31 = scmp.ne.s32.totalorder %s23, %s26
      %p32 = scmp.eq.s32.totalorder %s13, 0
      %p33 = por %p31, %p32
      %p34 = scmp.ne.s32.totalorder %s23, %s26
      %p35 = scmp.eq.s32.totalorder %s18, 1
      %p36 = por %p34, %p35
      %p37 = scmp.ne.s32.totalorder %s26, %s27
      %p38 = scmp.eq.s32.totalorder %s18, 0
      %p39 = por %p37, %p38
      %p40 = scmp.ne.s32.totalorder %s26, %s27
      %p41 = scmp.eq.s32.totalorder %s19, 1
      %p42 = por %p40, %p41
      %p44 = scmp.ne.s32.totalorder %s27, %s43
      %p45 = scmp.eq.s32.totalorder %s19, 0
      %p46 = por %p44, %p45
      %s47 = ssub.s32 %s13, %s20
      %p48 = scmp.eq.s32.totalorder %s47, 0
      %s50 = sadd.s32 %s49, 1
      %s51 = scalar_select %p48, %s49, %s50
      %p54 = pneg %p48
      %p55 = scmp.eq.s32.totalorder %s13, 1
      %p56 = por %p54, %p55
      %p57 = scmp.ne.s32.totalorder %s49, %s52
      %p58 = scmp.eq.s32.totalorder %s13, 0
      %p59 = por %p57, %p58
      %p60 = scmp.ne.s32.totalorder %s49, %s52
      %p61 = scmp.eq.s32.totalorder %s18, 1
      %p62 = por %p60, %p61
      %p63 = scmp.ne.s32.totalorder %s52, %s53
      %p64 = scmp.eq.s32.totalorder %s18, 0
      %p65 = por %p63, %p64
      %p66 = scmp.ne.s32.totalorder %s52, %s53
      %p67 = scmp.eq.s32.totalorder %s19, 1
      %p68 = por %p66, %p67
      %p70 = scmp.ne.s32.totalorder %s53, %s69
      %p71 = scmp.eq.s32.totalorder %s19, 0
      %p72 = por %p70, %p71
      %p73 = scmp.le.s32.totalorder 1, %s13
      %p74 = scmp.lt.s32.totalorder %s13, 3
      %p75 = pnand %p73, %p74
      %p76 = pneg %p75
      // Predicated region
      $region9: #{tpu_custom_call.1} parent=5 // pred_check
        _
      $region10: #{tpu_custom_call.1} parent=5 // pred_check_branch
        %78 = sbr.rel (%p75) target = $region12
      $region11: #{tpu_custom_call.1} parent=5 // pred_region
        %s79 = ssub.s32 %s13, 1
      $region12: #{tpu_custom_call.1} parent=5 // pred_fallthru
        _
      %p80 = scmp.lt.s32.totalorder %s13, 2
      // Predicated region
      $region13: #{tpu_custom_call.1} parent=5 // pred_check
        %p81 = pneg %p80
      $region14: #{tpu_custom_call.1} parent=5 // pred_check_branch
        %83 = sbr.rel (%p81) target = $region16
      $region15: #{tpu_custom_call.1} parent=5 // pred_region
        // Predicated region
        $region17: #{tpu_custom_call.1} parent=15 // pred_check
          %p84 = pneg %p33
        $region18: #{tpu_custom_call.1} parent=15 // pred_check_branch
          %86 = sbr.rel (%p84) target = $region20
        $region19: #{tpu_custom_call.1} parent=15 // pred_region
          %s87 = sand.u32 %s23, 1
          %s88 = scalar_lea.sflag [#allocation4], %s87
          %s89 = sand.u32 %s23, 1
          %s90 = smul.addr %s89, 64
          %s91 = scalar_lea.vmem [#allocation3], %s90
          %93 = vsyncadd %s88, 0
          %s94 = smul.addr %s13, 8
          %s95 = smul.addr %s94, 8
          %s96 = scalar_lea.hbm %s0, %s95
          %s97 = sshll.u32 %s96, 4
          %s98 = int_to_ptr.hbm [resolvable:$true] %s97
          %s99 = sshll.u32 %s91, 4
          %s100 = int_to_ptr.vmem [resolvable:$true] %s99
          %105 = dma.hbm_to_vmem [thread:$0]  %s98, 1024, %s100, %s88, 128, 128, 8
        $region20: #{tpu_custom_call.1} parent=15 // pred_fallthru
          _
      $region16: #{tpu_custom_call.1} parent=5 // pred_fallthru
        _
      %p106 = scmp.le.s32.totalorder 1, %s13
      %p107 = scmp.lt.s32.totalorder %s13, 3
      %p108 = pnand %p106, %p107
      %p109 = pneg %p108
      // Predicated region
      $region21: #{tpu_custom_call.1} parent=5 // pred_check
        _
      $region22: #{tpu_custom_call.1} parent=5 // pred_check_branch
        %111 = sbr.rel (%p108) target = $region24
      $region23: #{tpu_custom_call.1} parent=5 // pred_region
        %s112 = ssub.s32 %s13, 1
        %s113 = sand.u32 %s26, 1
        %s114 = scalar_lea.sflag [#allocation4], %s113
        %s115 = sand.u32 %s26, 1
        %s116 = smul.addr %s115, 64
        %s117 = scalar_lea.vmem [#allocation3], %s116
        // Predicated region
        $region25: #{tpu_custom_call.1} parent=23 // pred_check
          %p118 = pneg %p39
        $region26: #{tpu_custom_call.1} parent=23 // pred_check_branch
          %120 = sbr.rel (%p118) target = $region28
        $region27: #{tpu_custom_call.1} parent=23 // pred_region
          %122 = dma.done %s114, 1024
        $region28: #{tpu_custom_call.1} parent=23 // pred_fallthru
          _
        %s123 = sand.u32 %s26, 1
        %s124 = scalar_lea.sflag [#allocation4], %s123
        %s125 = sand.u32 %s26, 1
        %s126 = smul.addr %s125, 64
        %s127 = scalar_lea.vmem [#allocation3], %s126
        %p128 = pneg %p39
        %p129 = pneg %p36
        %p130 = pneg %p65
        %p131 = pneg %p62
        %s132 = sand.u32 %s52, 1
        %s133 = scalar_lea.sflag [#allocation5], %s132
        %s134 = sand.u32 %s52, 1
        %s135 = smul.addr %s134, 64
        %s136 = scalar_lea.vmem [#allocation6], %s135
        %vm137 = vcmask 64512
        %138 = vst.msk [vmem:[#allocation2] sm:$0xff] %vm137, -inf
        %vm139 = vcmask 58368
        %140 = vst.msk [vmem:[#allocation2 + $0x8] sm:$0x3] %vm139, -inf
        %141 = vst.msk [vmem:[#allocation2 + $0x10] sm:$0xff] %vm137, -inf
        %142 = vst.msk [vmem:[#allocation2 + $0x18] sm:$0x3] %vm139, -inf
        %143 = vst.msk [vmem:[#allocation2 + $0x20] sm:$0xff] %vm137, -inf
        %144 = vst.msk [vmem:[#allocation2 + $0x28] sm:$0x3] %vm139, -inf
        %145 = vst.msk [vmem:[#allocation2 + $0x30] sm:$0xff] %vm137, -inf
        %146 = vst.msk [vmem:[#allocation2 + $0x38] sm:$0x3] %vm139, -inf
        %147 = vst.msk [vmem:[#allocation2 + $0x40] sm:$0xff] %vm137, -inf
        %148 = vst.msk [vmem:[#allocation2 + $0x48] sm:$0x3] %vm139, -inf
        %149 = vst.msk [vmem:[#allocation2 + $0x50] sm:$0xff] %vm137, -inf
        %150 = vst.msk [vmem:[#allocation2 + $0x58] sm:$0x3] %vm139, -inf
        %151 = vst.msk [vmem:[#allocation2 + $0x60] sm:$0xff] %vm137, -inf
        %152 = vst.msk [vmem:[#allocation2 + $0x68] sm:$0x3] %vm139, -inf
        %153 = vst.msk [vmem:[#allocation2 + $0x70] sm:$0xff] %vm137, -inf
        %154 = vst.msk [vmem:[#allocation2 + $0x78] sm:$0x3] %vm139, -inf
        %155 = vst.msk [vmem:[#allocation2 + $0x80] sm:$0xff] %vm137, -inf
        %156 = vst.msk [vmem:[#allocation2 + $0x88] sm:$0x3] %vm139, -inf
        %157 = vst.msk [vmem:[#allocation2 + $0x90] sm:$0xff] %vm137, -inf
        %158 = vst.msk [vmem:[#allocation2 + $0x98] sm:$0x3] %vm139, -inf
        %v159 = vld [vmem:[%s117] sm:$0xff]
        %v160 = vld [vmem:[%s117 + $0x8] sm:$0xff]
        %v161 = vld [vmem:[%s117 + $0x10] sm:$0xff]
        %v162 = vld [vmem:[%s117 + $0x18] sm:$0xff]
        %v163 = vld [vmem:[%s117 + $0x20] sm:$0xff]
        %v164 = vld [vmem:[%s117 + $0x28] sm:$0xff]
        %v165 = vld [vmem:[%s117 + $0x30] sm:$0xff]
        %v166 = vld [vmem:[%s117 + $0x38] sm:$0xff]
        %s167 = scalar_lea.vmem [#allocation2], 16
        %168 = vst.msk [vmem:[%s167 + $0x1] sm:$0xff] %vm137, %v159
        %169 = vst.msk [vmem:[%s167 + $0x11] sm:$0xff] %vm137, %v160
        %170 = vst.msk [vmem:[%s167 + $0x21] sm:$0xff] %vm137, %v161
        %171 = vst.msk [vmem:[%s167 + $0x31] sm:$0xff] %vm137, %v162
        %172 = vst.msk [vmem:[%s167 + $0x41] sm:$0xff] %vm137, %v163
        %173 = vst.msk [vmem:[%s167 + $0x51] sm:$0xff] %vm137, %v164
        %174 = vst.msk [vmem:[%s167 + $0x61] sm:$0xff] %vm137, %v165
        %175 = vst.msk [vmem:[%s167 + $0x71] sm:$0xff] %vm137, %v166
        %v176 = vld [vmem:[#allocation2] sm:$0xff]
        %v177 = vld [vmem:[#allocation2 + $0x8] sm:$0x3]
        %v178 = vld [vmem:[#allocation2 + $0x10] sm:$0xff]
        %v179 = vld [vmem:[#allocation2 + $0x18] sm:$0x3]
        %v180 = vld [vmem:[#allocation2 + $0x20] sm:$0xff]
        %v181 = vld [vmem:[#allocation2 + $0x28] sm:$0x3]
        %v182 = vld [vmem:[#allocation2 + $0x30] sm:$0xff]
        %v183 = vld [vmem:[#allocation2 + $0x38] sm:$0x3]
        %v184 = vld [vmem:[#allocation2 + $0x40] sm:$0xff]
        %v185 = vld [vmem:[#allocation2 + $0x48] sm:$0x3]
        %v186 = vld [vmem:[#allocation2 + $0x50] sm:$0xff]
        %v187 = vld [vmem:[#allocation2 + $0x58] sm:$0x3]
        %v188 = vld [vmem:[#allocation2 + $0x60] sm:$0xff]
        %v189 = vld [vmem:[#allocation2 + $0x68] sm:$0x3]
        %v190 = vld [vmem:[#allocation2 + $0x70] sm:$0xff]
        %v191 = vld [vmem:[#allocation2 + $0x78] sm:$0x3]
        %v192 = vld [vmem:[%s167] sm:$0xff]
        %v193 = vld [vmem:[%s167 + $0x8] sm:$0x3]
        %v194 = vld [vmem:[%s167 + $0x10] sm:$0xff]
        %v195 = vld [vmem:[%s167 + $0x18] sm:$0x3]
        %v196 = vld [vmem:[%s167 + $0x20] sm:$0xff]
        %v197 = vld [vmem:[%s167 + $0x28] sm:$0x3]
        %v198 = vld [vmem:[%s167 + $0x30] sm:$0xff]
        %v199 = vld [vmem:[%s167 + $0x38] sm:$0x3]
        %v200 = vld [vmem:[%s167 + $0x40] sm:$0xff]
        %v201 = vld [vmem:[%s167 + $0x48] sm:$0x3]
        %v202 = vld [vmem:[%s167 + $0x50] sm:$0xff]
        %v203 = vld [vmem:[%s167 + $0x58] sm:$0x3]
        %v204 = vld [vmem:[%s167 + $0x60] sm:$0xff]
        %v205 = vld [vmem:[%s167 + $0x68] sm:$0x3]
        %v206 = vld [vmem:[%s167 + $0x70] sm:$0xff]
        %v207 = vld [vmem:[%s167 + $0x78] sm:$0x3]
        %v208 = vmax.f32 %v176, %v192
        %v209 = vmax.f32 %v177, %v193
        %v210 = vmax.f32 %v178, %v194
        %v211 = vmax.f32 %v179, %v195
        %v212 = vmax.f32 %v180, %v196
        %v213 = vmax.f32 %v181, %v197
        %v214 = vmax.f32 %v182, %v198
        %v215 = vmax.f32 %v183, %v199
        %v216 = vmax.f32 %v184, %v200
        %v217 = vmax.f32 %v185, %v201
        %v218 = vmax.f32 %v186, %v202
        %v219 = vmax.f32 %v187, %v203
        %v220 = vmax.f32 %v188, %v204
        %v221 = vmax.f32 %v189, %v205
        %v222 = vmax.f32 %v190, %v206
        %v223 = vmax.f32 %v191, %v207
        %s224 = scalar_lea.vmem [#allocation2], 32
        %v225 = vld [vmem:[%s224] sm:$0xff]
        %v226 = vld [vmem:[%s224 + $0x8] sm:$0x3]
        %v227 = vld [vmem:[%s224 + $0x10] sm:$0xff]
        %v228 = vld [vmem:[%s224 + $0x18] sm:$0x3]
        %v229 = vld [vmem:[%s224 + $0x20] sm:$0xff]
        %v230 = vld [vmem:[%s224 + $0x28] sm:$0x3]
        %v231 = vld [vmem:[%s224 + $0x30] sm:$0xff]
        %v232 = vld [vmem:[%s224 + $0x38] sm:$0x3]
        %v233 = vld [vmem:[%s224 + $0x40] sm:$0xff]
        %v234 = vld [vmem:[%s224 + $0x48] sm:$0x3]
        %v235 = vld [vmem:[%s224 + $0x50] sm:$0xff]
        %v236 = vld [vmem:[%s224 + $0x58] sm:$0x3]
        %v237 = vld [vmem:[%s224 + $0x60] sm:$0xff]
        %v238 = vld [vmem:[%s224 + $0x68] sm:$0x3]
        %v239 = vld [vmem:[%s224 + $0x70] sm:$0xff]
        %v240 = vld [vmem:[%s224 + $0x78] sm:$0x3]
        %v241 = vmax.f32 %v208, %v225
        %v242 = vmax.f32 %v209, %v226
        %v243 = vmax.f32 %v210, %v227
        %v244 = vmax.f32 %v211, %v228
        %v245 = vmax.f32 %v212, %v229
        %v246 = vmax.f32 %v213, %v230
        %v247 = vmax.f32 %v214, %v231
        %v248 = vmax.f32 %v215, %v232
        %v249 = vmax.f32 %v216, %v233
        %v250 = vmax.f32 %v217, %v234
        %v251 = vmax.f32 %v218, %v235
        %v252 = vmax.f32 %v219, %v236
        %v253 = vmax.f32 %v220, %v237
        %v254 = vmax.f32 %v221, %v238
        %v255 = vmax.f32 %v222, %v239
        %v256 = vmax.f32 %v223, %v240
        %vm273 = vcmask 1046528
        %v274 = vrot.slane %v241, 1
        %v275 = vrot.slane %v242, 1
        %v276 = vsel %vm273, %v274, %v275
        %v277 = vrot.slane %v243, 1
        %v278 = vrot.slane %v244, 1
        %v279 = vsel %vm273, %v277, %v278
        %v280 = vrot.slane %v245, 1
        %v281 = vrot.slane %v246, 1
        %v282 = vsel %vm273, %v280, %v281
        %v283 = vrot.slane %v247, 1
        %v284 = vrot.slane %v248, 1
        %v285 = vsel %vm273, %v283, %v284
        %v286 = vrot.slane %v249, 1
        %v287 = vrot.slane %v250, 1
        %v288 = vsel %vm273, %v286, %v287
        %v289 = vrot.slane %v251, 1
        %v290 = vrot.slane %v252, 1
        %v291 = vsel %vm273, %v289, %v290
        %v292 = vrot.slane %v253, 1
        %v293 = vrot.slane %v254, 1
        %v294 = vsel %vm273, %v292, %v293
        %v295 = vrot.slane %v255, 1
        %v296 = vrot.slane %v256, 1
        %v297 = vsel %vm273, %v295, %v296
        %v306 = vmax.f32 %v241, %v276
        %v307 = vmax.f32 %v243, %v279
        %v308 = vmax.f32 %v245, %v282
        %v309 = vmax.f32 %v247, %v285
        %v310 = vmax.f32 %v249, %v288
        %v311 = vmax.f32 %v251, %v291
        %v312 = vmax.f32 %v253, %v294
        %v313 = vmax.f32 %v255, %v297
        %vm314 = vcmask 1045504
        %v315 = vrot.slane %v241, 2
        %v316 = vrot.slane %v242, 2
        %v317 = vsel %vm314, %v315, %v316
        %v318 = vrot.slane %v243, 2
        %v319 = vrot.slane %v244, 2
        %v320 = vsel %vm314, %v318, %v319
        %v321 = vrot.slane %v245, 2
        %v322 = vrot.slane %v246, 2
        %v323 = vsel %vm314, %v321, %v322
        %v324 = vrot.slane %v247, 2
        %v325 = vrot.slane %v248, 2
        %v326 = vsel %vm314, %v324, %v325
        %v327 = vrot.slane %v249, 2
        %v328 = vrot.slane %v250, 2
        %v329 = vsel %vm314, %v327, %v328
        %v330 = vrot.slane %v251, 2
        %v331 = vrot.slane %v252, 2
        %v332 = vsel %vm314, %v330, %v331
        %v333 = vrot.slane %v253, 2
        %v334 = vrot.slane %v254, 2
        %v335 = vsel %vm314, %v333, %v334
        %v336 = vrot.slane %v255, 2
        %v337 = vrot.slane %v256, 2
        %v338 = vsel %vm314, %v336, %v337
        %v347 = vmax.f32 %v306, %v317
        %v348 = vmax.f32 %v307, %v320
        %v349 = vmax.f32 %v308, %v323
        %v350 = vmax.f32 %v309, %v326
        %v351 = vmax.f32 %v310, %v329
        %v352 = vmax.f32 %v311, %v332
        %v353 = vmax.f32 %v312, %v335
        %v354 = vmax.f32 %v313, %v338
        %355 = vst.msk [vmem:[%s136] sm:$0xff] %vm137, %v347
        %356 = vst.msk [vmem:[%s136 + $0x8] sm:$0xff] %vm137, %v348
        %357 = vst.msk [vmem:[%s136 + $0x10] sm:$0xff] %vm137, %v349
        %358 = vst.msk [vmem:[%s136 + $0x18] sm:$0xff] %vm137, %v350
        %359 = vst.msk [vmem:[%s136 + $0x20] sm:$0xff] %vm137, %v351
        %360 = vst.msk [vmem:[%s136 + $0x28] sm:$0xff] %vm137, %v352
        %361 = vst.msk [vmem:[%s136 + $0x30] sm:$0xff] %vm137, %v353
        %362 = vst.msk [vmem:[%s136 + $0x38] sm:$0xff] %vm137, %v354
        %s363 = sand.u32 %s52, 1
        %s364 = scalar_lea.sflag [#allocation5], %s363
        %s365 = sand.u32 %s52, 1
        %s366 = smul.addr %s365, 64
        %s367 = scalar_lea.vmem [#allocation6], %s366
        // Predicated region
        $region29: #{tpu_custom_call.1} parent=23 // pred_check
          %p368 = pneg %p62
        $region30: #{tpu_custom_call.1} parent=23 // pred_check_branch
          %370 = sbr.rel (%p368) target = $region32
        $region31: #{tpu_custom_call.1} parent=23 // pred_region
          %372 = vsyncadd %s364, 0
          %s373 = smul.addr %s18, 8
          %s374 = smul.addr %s373, 8
          %s375 = scalar_lea.hbm %s1, %s374
          %s376 = sshll.u32 %s367, 4
          %s377 = int_to_ptr.vmem [resolvable:$true] %s376
          %s378 = sshll.u32 %s375, 4
          %s379 = int_to_ptr.hbm [resolvable:$true] %s378
          %384 = dma.vmem_to_hbm [thread:$0]  %s377, 1024, %s379, %s364, 128, 128, 8
        $region32: #{tpu_custom_call.1} parent=23 // pred_fallthru
          _
      $region24: #{tpu_custom_call.1} parent=5 // pred_fallthru
        _
      %p385 = scmp.le.s32.totalorder 2, %s13
      // Predicated region
      $region33: #{tpu_custom_call.1} parent=5 // pred_check
        %p386 = pneg %p385
      $region34: #{tpu_custom_call.1} parent=5 // pred_check_branch
        %388 = sbr.rel (%p386) target = $region36
      $region35: #{tpu_custom_call.1} parent=5 // pred_region
        %s389 = ssub.s32 %s13, 2
        // Predicated region
        $region37: #{tpu_custom_call.1} parent=35 // pred_check
          %p390 = pneg %p68
        $region38: #{tpu_custom_call.1} parent=35 // pred_check_branch
          %392 = sbr.rel (%p390) target = $region40
        $region39: #{tpu_custom_call.1} parent=35 // pred_region
          %s393 = sand.u32 %s53, 1
          %s394 = scalar_lea.sflag [#allocation5], %s393
          %s395 = sand.u32 %s53, 1
          %s396 = smul.addr %s395, 64
          %s397 = scalar_lea.vmem [#allocation6], %s396
          %399 = dma.done %s394, 1024
        $region40: #{tpu_custom_call.1} parent=35 // pred_fallthru
          _
      $region36: #{tpu_custom_call.1} parent=5 // pred_fallthru
        _
    $region6: #{tpu_custom_call.1} parent=1 // loop_footer
      %s17 = sadd.s32 1, %s13
    $region7: #{tpu_custom_call.1} parent=1 // loop_footer_branch
      %12 = sbr.rel target = $region3
    $region8: #{tpu_custom_call.1} parent=1 // loop_exit
      _
    %400 = vsyncpa [#allocation4], 1
    %s401 = scalar_lea.sflag [#allocation4], 1
    %402 = vsyncpa %s401, 1
    %403 = vsyncpa [#allocation5], 1
    %s404 = scalar_lea.sflag [#allocation5], 1
    %405 = vsyncpa %s404, 1

</llo_original>
